<compile_context>
chip_gen: v7x
topology: tpu7x:2x2x1
jax: 0.10.0
libtpu: 0.0.40
codegen_flags: <defaults>
</compile_context>

<pallas_src>
import functools

import jax
import jax.numpy as jnp
from jax.experimental import pallas as pl
from jax.experimental.pallas import tpu as pltpu


def _round_up(x, m):
    return ((x + m - 1) // m) * m


def _fused_mlp_kernel(*refs, n_hidden):
    """Fused masked-MLP forward on one batch tile.

    refs layout: [x] + [w_t, b] * n_hidden + [w_out_t, b_out] + [out]
      x       : (TB,      Din_pad)  f32
      w_t     : (Din_pad, Dh)       bf16  (pre-transposed, mask pre-folded)
      b       : (1,       Dh)       f32
      w_out_t : (Dh,      Dout_pad) bf16  (zero-padded to 128 lanes)
      b_out   : (1,       Dout_pad) f32
      out     : (TB,      Dout_pad) f32
    """
    out_ref = refs[-1]
    h = refs[0][...]                       # f32 activations
    idx = 1
    for _ in range(n_hidden):
        w_ref, b_ref = refs[idx], refs[idx + 1]
        idx += 2
        y = jnp.dot(h.astype(w_ref.dtype), w_ref[...],
                    preferred_element_type=jnp.float32)
        h = jnp.maximum(y + b_ref[...], 0.0)          # bias + ReLU in f32
    w_ref, b_ref = refs[idx], refs[idx + 1]
    y = jnp.dot(h.astype(w_ref.dtype), w_ref[...],
                preferred_element_type=jnp.float32)
    out_ref[...] = (y + b_ref[...]).astype(out_ref.dtype)


def _forward_impl(x, flat_params, *, input_dim, output_dim):
    """Jitted wrapper: reshape, pad, one fused pallas_call, slice."""
    n_layers = len(flat_params) // 2                  # hidden layers + output
    n_hidden = n_layers - 1
    in_pad = flat_params[0].shape[0]                  # padded feature dim
    out_pad = flat_params[-2].shape[1]                # padded logits dim

    x = x.reshape(-1, input_dim).astype(jnp.float32)  # x.view(-1, 784)
    B = x.shape[0]
    b8 = _round_up(B, 8)
    tb = b8 if b8 <= 256 else 256                     # batch tile (sublane-dense)
    B_pad = _round_up(B, tb)
    x = jnp.pad(x, ((0, B_pad - B), (0, in_pad - input_dim)))

    in_specs = [pl.BlockSpec((tb, in_pad), lambda i: (i, 0))]
    for p in flat_params:                             # weights/biases: resident
        in_specs.append(pl.BlockSpec(p.shape, lambda i: (0, 0)))
    out_spec = pl.BlockSpec((tb, out_pad), lambda i: (i, 0))

    kernel = functools.partial(_fused_mlp_kernel, n_hidden=n_hidden)
    out = pl.pallas_call(
        kernel,
        out_shape=jax.ShapeDtypeStruct((B_pad, out_pad), jnp.float32),
        grid=(B_pad // tb,),
        in_specs=in_specs,
        out_specs=out_spec,
        compiler_params=pltpu.CompilerParams(
            dimension_semantics=("parallel",)),
    )(x, *flat_params)
    return out[:B, :output_dim]


class NetPallas:
    """JAX/Pallas mirror of the PyTorch pruning Net (forward pass only)."""

    def __init__(self, key, input_dim=28 * 28, hidden_dims=(128, 128),
                 output_dim=10, param_dtype=jnp.bfloat16):
        self.input_dim = input_dim
        self.output_dim = output_dim
        self.in_pad = _round_up(input_dim, 128)
        self.out_pad = _round_up(output_dim, 128)
        self.param_dtype = param_dtype

        # f32 master copies (torch Linear init), transposed once to (Din, Dout).
        self._w_f32 = []
        self._b_f32 = []
        self.masks = []
        prev = input_dim
        for d in hidden_dims:
            key, kw, kb = jax.random.split(key, 3)
            bound = 1.0 / float(prev) ** 0.5
            w = jax.random.uniform(kw, (d, prev), jnp.float32, -bound, bound)
            b = jax.random.uniform(kb, (d,), jnp.float32, -bound, bound)
            self._w_f32.append(w.T)                    # (prev, d)
            self._b_f32.append(b)
            self.masks.append(jnp.ones((d,), jnp.float32))
            prev = d
        key, kw, kb = jax.random.split(key, 3)
        bound = 1.0 / float(prev) ** 0.5
        w_out = jax.random.uniform(kw, (output_dim, prev), jnp.float32, -bound, bound)
        b_out = jax.random.uniform(kb, (output_dim,), jnp.float32, -bound, bound)
        self._w_f32.append(w_out.T)                    # (prev, output_dim)
        self._b_f32.append(b_out)

        self._jit_forward = jax.jit(functools.partial(
            _forward_impl, input_dim=input_dim, output_dim=output_dim))
        self._refresh_params()

    # TODO(synk): update_masks() (pruning-threshold recomputation) is a
    # training-time host-side op; here masks are set externally via set_mask.
    def set_mask(self, i, mask):
        self.masks[i] = mask.astype(jnp.float32)
        self._refresh_params()

    def _refresh_params(self):
        """Fold masks into weights, cast to bf16, pad to lane-dense shapes."""
        flat = []
        ref_w, ref_b = [], []
        n_hidden = len(self.masks)
        for i in range(n_hidden):
            w = self._w_f32[i] * self.masks[i][None, :]     # mask folded (cols)
            w_lp = w.astype(self.param_dtype)
            ref_w.append(w_lp.astype(jnp.float32))
            ref_b.append(self._b_f32[i])
            if i == 0:                                       # pad K: 784 -> 896
                pad = jnp.zeros((self.in_pad - self.input_dim, w_lp.shape[1]),
                                self.param_dtype)
                w_lp = jnp.concatenate([w_lp, pad], axis=0)
            flat += [w_lp, self._b_f32[i].reshape(1, -1)]
        # Output layer (never masked in torch forward); pad logits to 128 lanes.
        w = self._w_f32[-1].astype(self.param_dtype)
        ref_w.append(w.astype(jnp.float32))
        ref_b.append(self._b_f32[-1])
        w_pad = jnp.zeros((w.shape[0], self.out_pad), self.param_dtype
                          ).at[:, :self.output_dim].set(w)
        b_pad = jnp.zeros((1, self.out_pad), jnp.float32
                          ).at[:, :self.output_dim].set(self._b_f32[-1])
        flat += [w_pad, b_pad]
        self._flat_params = tuple(flat)
        self._ref_weights = ref_w       # bf16-quantized, f32-upcast, unpadded
        self._ref_biases = ref_b

    def forward(self, x):
        return self._jit_forward(x, self._flat_params)


def _reference_forward(net, x):
    """Pure-JAX reference using the same (bf16-quantized) weights, f32 math."""
    x = x.reshape(-1, net.input_dim).astype(jnp.float32)
    n = len(net._ref_weights)
    for i in range(n - 1):
        x = jnp.maximum(x @ net._ref_weights[i] + net._ref_biases[i], 0.0)
    return x @ net._ref_weights[-1] + net._ref_biases[-1]


if __name__ == "__main__":
    key = jax.random.PRNGKey(0)
    k_param, k_x, k_mask = jax.random.split(key, 3)

    # Small, module-consistent shapes: MNIST-like NCHW input, 128-wide hiddens.
    net = NetPallas(k_param, input_dim=28 * 28, hidden_dims=(128, 128),
                    output_dim=10)

    # Exercise the pruning path: prune ~half the neurons of the first hidden
    # layer (mask is folded into the bf16 weights on the host).
    mask0 = (jax.random.uniform(k_mask, (128,)) > 0.5).astype(jnp.float32)
    net.set_mask(0, mask0)

    x = jax.random.normal(k_x, (2, 1, 28, 28), jnp.float32)  # NCHW like torch

    out = net.forward(x)
    out = jax.block_until_ready(out)

    ref = _reference_forward(net, x)
    assert out.shape == (2, 10), out.shape
    # bf16 activation casts inside the kernel vs f32 reference activations.
    assert jnp.allclose(out, ref, atol=3e-2, rtol=3e-2), "mismatch vs reference"

    print("KERNEL_OK")
</pallas_src>

<mosaic_0001>
module attributes {stable_mosaic.version = 11 : i64} {
  func.func @_fused_mlp_kernel(%arg0: i32, %arg1: memref<8x896xf32, #tpu.memory_space<vmem>>, %arg2: memref<896x128xbf16, #tpu.memory_space<vmem>>, %arg3: memref<1x128xf32, #tpu.memory_space<vmem>>, %arg4: memref<128x128xbf16, #tpu.memory_space<vmem>>, %arg5: memref<1x128xf32, #tpu.memory_space<vmem>>, %arg6: memref<128x128xbf16, #tpu.memory_space<vmem>>, %arg7: memref<1x128xf32, #tpu.memory_space<vmem>>, %arg8: memref<8x128xf32, #tpu.memory_space<vmem>>) attributes {dimension_semantics = [#tpu.dimension_semantics<parallel>], iteration_bounds = array<i64: 1>, scalar_prefetch = 0 : i64, scratch_operands = 0 : i64, tpu.core_type = #tpu.core_type<tc>, window_params = [{transform_indices = @transform_0, window_bounds = array<i64: 8, 896>}, {pipeline_mode = #tpu.pipeline_mode<synchronous>, transform_indices = @transform_1, window_bounds = array<i64: 896, 128>}, {pipeline_mode = #tpu.pipeline_mode<synchronous>, transform_indices = @transform_2, window_bounds = array<i64: 1, 128>}, {pipeline_mode = #tpu.pipeline_mode<synchronous>, transform_indices = @transform_3, window_bounds = array<i64: 128, 128>}, {pipeline_mode = #tpu.pipeline_mode<synchronous>, transform_indices = @transform_4, window_bounds = array<i64: 1, 128>}, {pipeline_mode = #tpu.pipeline_mode<synchronous>, transform_indices = @transform_5, window_bounds = array<i64: 128, 128>}, {pipeline_mode = #tpu.pipeline_mode<synchronous>, transform_indices = @transform_6, window_bounds = array<i64: 1, 128>}, {transform_indices = @transform_7, window_bounds = array<i64: 8, 128>}]} {
    %c0 = arith.constant 0 : index
    %c0_0 = arith.constant 0 : index
    %0 = vector.load %arg1[%c0, %c0_0] : memref<8x896xf32, #tpu.memory_space<vmem>>, vector<8x896xf32>
    %1 = arith.truncf %0 : vector<8x896xf32> to vector<8x896xbf16>
    %c0_1 = arith.constant 0 : index
    %c0_2 = arith.constant 0 : index
    %2 = vector.load %arg2[%c0_1, %c0_2] : memref<896x128xbf16, #tpu.memory_space<vmem>>, vector<896x128xbf16>
    %cst = arith.constant dense<0.000000e+00> : vector<8x128xf32>
    %3 = tpu.matmul %1, %2, %cst {dimension_numbers = #tpu.dot_dimension_numbers<[1], [0], [0], [1], [0, 0, 1, 1], [], []>} : vector<8x896xbf16>, vector<896x128xbf16>, vector<8x128xf32> -> vector<8x128xf32>
    %c0_3 = arith.constant 0 : index
    %c0_4 = arith.constant 0 : index
    %4 = vector.load %arg3[%c0_3, %c0_4] : memref<1x128xf32, #tpu.memory_space<vmem>>, vector<1x128xf32>
    %5 = vector.broadcast %4 : vector<1x128xf32> to vector<8x128xf32>
    %6 = arith.addf %3, %5 : vector<8x128xf32>
    %cst_5 = arith.constant 0.000000e+00 : f32
    %7 = vector.broadcast %cst_5 : f32 to vector<8x128xf32>
    %8 = arith.maximumf %6, %7 : vector<8x128xf32>
    %9 = arith.truncf %8 : vector<8x128xf32> to vector<8x128xbf16>
    %c0_6 = arith.constant 0 : index
    %c0_7 = arith.constant 0 : index
    %10 = vector.load %arg4[%c0_6, %c0_7] : memref<128x128xbf16, #tpu.memory_space<vmem>>, vector<128x128xbf16>
    %cst_8 = arith.constant dense<0.000000e+00> : vector<8x128xf32>
    %11 = tpu.matmul %9, %10, %cst_8 {dimension_numbers = #tpu.dot_dimension_numbers<[1], [0], [0], [1], [0, 0, 1, 1], [], []>} : vector<8x128xbf16>, vector<128x128xbf16>, vector<8x128xf32> -> vector<8x128xf32>
    %c0_9 = arith.constant 0 : index
    %c0_10 = arith.constant 0 : index
    %12 = vector.load %arg5[%c0_9, %c0_10] : memref<1x128xf32, #tpu.memory_space<vmem>>, vector<1x128xf32>
    %13 = vector.broadcast %12 : vector<1x128xf32> to vector<8x128xf32>
    %14 = arith.addf %11, %13 : vector<8x128xf32>
    %cst_11 = arith.constant 0.000000e+00 : f32
    %15 = vector.broadcast %cst_11 : f32 to vector<8x128xf32>
    %16 = arith.maximumf %14, %15 : vector<8x128xf32>
    %17 = arith.truncf %16 : vector<8x128xf32> to vector<8x128xbf16>
    %c0_12 = arith.constant 0 : index
    %c0_13 = arith.constant 0 : index
    %18 = vector.load %arg6[%c0_12, %c0_13] : memref<128x128xbf16, #tpu.memory_space<vmem>>, vector<128x128xbf16>
    %cst_14 = arith.constant dense<0.000000e+00> : vector<8x128xf32>
    %19 = tpu.matmul %17, %18, %cst_14 {dimension_numbers = #tpu.dot_dimension_numbers<[1], [0], [0], [1], [0, 0, 1, 1], [], []>} : vector<8x128xbf16>, vector<128x128xbf16>, vector<8x128xf32> -> vector<8x128xf32>
    %c0_15 = arith.constant 0 : index
    %c0_16 = arith.constant 0 : index
    %20 = vector.load %arg7[%c0_15, %c0_16] : memref<1x128xf32, #tpu.memory_space<vmem>>, vector<1x128xf32>
    %21 = vector.broadcast %20 : vector<1x128xf32> to vector<8x128xf32>
    %22 = arith.addf %19, %21 : vector<8x128xf32>
    %c0_17 = arith.constant 0 : index
    %c0_18 = arith.constant 0 : index
    %23 = vector.load %arg8[%c0_17, %c0_18] : memref<8x128xf32, #tpu.memory_space<vmem>>, vector<8x128xf32>
    tpu.vector_store %arg8[%c0_17, %c0_18], %22 {strides = array<i32>} : memref<8x128xf32, #tpu.memory_space<vmem>>, vector<8x128xf32>,
    return
  }
  func.func @transform_0(%arg0: i32) -> (i32, i32) {
    %c0_i32 = arith.constant 0 : i32
    %c0_i32_0 = arith.constant 0 : i32
    return %arg0, %c0_i32 : i32, i32
  }
  func.func @transform_1(%arg0: i32) -> (i32, i32) {
    %c0_i32 = arith.constant 0 : i32
    %c0_i32_0 = arith.constant 0 : i32
    %c0_i32_1 = arith.constant 0 : i32
    return %c0_i32, %c0_i32_0 : i32, i32
  }
  func.func @transform_2(%arg0: i32) -> (i32, i32) {
    %c0_i32 = arith.constant 0 : i32
    %c0_i32_0 = arith.constant 0 : i32
    %c0_i32_1 = arith.constant 0 : i32
    return %c0_i32, %c0_i32_0 : i32, i32
  }
  func.func @transform_3(%arg0: i32) -> (i32, i32) {
    %c0_i32 = arith.constant 0 : i32
    %c0_i32_0 = arith.constant 0 : i32
    %c0_i32_1 = arith.constant 0 : i32
    return %c0_i32, %c0_i32_0 : i32, i32
  }
  func.func @transform_4(%arg0: i32) -> (i32, i32) {
    %c0_i32 = arith.constant 0 : i32
    %c0_i32_0 = arith.constant 0 : i32
    %c0_i32_1 = arith.constant 0 : i32
    return %c0_i32, %c0_i32_0 : i32, i32
  }
  func.func @transform_5(%arg0: i32) -> (i32, i32) {
    %c0_i32 = arith.constant 0 : i32
    %c0_i32_0 = arith.constant 0 : i32
    %c0_i32_1 = arith.constant 0 : i32
    return %c0_i32, %c0_i32_0 : i32, i32
  }
  func.func @transform_6(%arg0: i32) -> (i32, i32) {
    %c0_i32 = arith.constant 0 : i32
    %c0_i32_0 = arith.constant 0 : i32
    %c0_i32_1 = arith.constant 0 : i32
    return %c0_i32, %c0_i32_0 : i32, i32
  }
  func.func @transform_7(%arg0: i32) -> (i32, i32) {
    %c0_i32 = arith.constant 0 : i32
    %c0_i32_0 = arith.constant 0 : i32
    return %arg0, %c0_i32 : i32, i32
  }
}

</mosaic_0001>

<llo_original>
// kernel: _forward_impl.1
$region0: #{_forward_impl.1}
  #allocation0 [shape = 'u32[]', space=smem, size = 0x4, offset = 0x4, fixed_abs, tag = 'smem constant byte address 0x4 - core index']
  #allocation1 [shape = 'u32[144,128]{1,0:T(1,128)}', space=vmem, size = 0x12000, scoped, tag = 'internal scratch']
  %s0 = inlined_call_operand.vmem [shape: f32[8,896], index: 0, kind: input, shape index: {}]
  %s1 = inlined_call_operand.hbm [shape: bf16[896,128], index: 1, kind: input, shape index: {}]
  %s2 = inlined_call_operand.vmem [shape: f32[1,128], index: 2, kind: input, shape index: {}]
  %s3 = inlined_call_operand.vmem [shape: bf16[128,128], index: 3, kind: input, shape index: {}]
  %s4 = inlined_call_operand.vmem [shape: f32[1,128], index: 4, kind: input, shape index: {}]
  %s5 = inlined_call_operand.vmem [shape: bf16[128,128], index: 5, kind: input, shape index: {}]
  %s6 = inlined_call_operand.vmem [shape: f32[1,128], index: 6, kind: input, shape index: {}]
  %s7 = inlined_call_operand.vmem [shape: f32[8,128], index: 7, kind: output, shape index: {}]
  %s8 = sld [smem:[#allocation0]]
  $region42: #{_forward_impl.1} parent=0
    _
  %s10 = ssub.s32 1, %s8
  %s11 = scalar_select 0, %s10, %s8
  $region1: #{_forward_impl.1} parent=0
    #allocation2 [shape = 'u8[229376]{0}', space=vmem, size = 0x38000, scoped, tag = 'input window, operand 1, single buffered']
    #allocation3 [shape = 's32[1]{0}', space=sflag, size = 0x4, scoped, tag = 'scoped memory for _forward_impl.1']
    %12 = vsyncpa [#allocation3], 0
    // Predicated region
    $region2: #{_forward_impl.1} parent=1 // pred_check
      _
    $region3: #{_forward_impl.1} parent=1 // pred_check_branch
      %14 = sbr.rel (0) target = $region5
    $region4: #{_forward_impl.1} parent=1 // pred_region
      _
    $region5: #{_forward_impl.1} parent=1 // pred_fallthru
      _
    // Predicated region
    $region6: #{_forward_impl.1} parent=1 // pred_check
      _
    $region7: #{_forward_impl.1} parent=1 // pred_check_branch
      %16 = sbr.rel (0) target = $region9
    $region8: #{_forward_impl.1} parent=1 // pred_region
      %s18 = ssub.s32 7168, 7168
      %19 = vsyncadd [#allocation3], %s18
      %s20 = sshll.u32 [#allocation2], 4
      %s21 = int_to_ptr.vmem [resolvable:$true] %s20
      %26 = dma.hbm_to_vmem [thread:$0]  %s1, 7168, %s21, [#allocation3], 64, 64, 4
    $region9: #{_forward_impl.1} parent=1 // pred_fallthru
      _
    // Predicated region
    $region10: #{_forward_impl.1} parent=1 // pred_check
      _
    $region11: #{_forward_impl.1} parent=1 // pred_check_branch
      %28 = sbr.rel (0) target = $region13
    $region12: #{_forward_impl.1} parent=1 // pred_region
      _
    $region13: #{_forward_impl.1} parent=1 // pred_fallthru
      _
    // Predicated region
    $region14: #{_forward_impl.1} parent=1 // pred_check
      _
    $region15: #{_forward_impl.1} parent=1 // pred_check_branch
      %30 = sbr.rel (0) target = $region17
    $region16: #{_forward_impl.1} parent=1 // pred_region
      _
    $region17: #{_forward_impl.1} parent=1 // pred_fallthru
      _
    // Predicated region
    $region18: #{_forward_impl.1} parent=1 // pred_check
      _
    $region19: #{_forward_impl.1} parent=1 // pred_check_branch
      %32 = sbr.rel (0) target = $region21
    $region20: #{_forward_impl.1} parent=1 // pred_region
      _
    $region21: #{_forward_impl.1} parent=1 // pred_fallthru
      _
    // Predicated region
    $region22: #{_forward_impl.1} parent=1 // pred_check
      _
    $region23: #{_forward_impl.1} parent=1 // pred_check_branch
      %34 = sbr.rel (0) target = $region25
    $region24: #{_forward_impl.1} parent=1 // pred_region
      _
    $region25: #{_forward_impl.1} parent=1 // pred_fallthru
      _
    // Predicated region
    $region26: #{_forward_impl.1} parent=1 // pred_check
      _
    $region27: #{_forward_impl.1} parent=1 // pred_check_branch
      %36 = sbr.rel (0) target = $region29
    $region28: #{_forward_impl.1} parent=1 // pred_region
      _
    $region29: #{_forward_impl.1} parent=1 // pred_fallthru
      _
    // Predicated region
    $region30: #{_forward_impl.1} parent=1 // pred_check
      _
    $region31: #{_forward_impl.1} parent=1 // pred_check_branch
      %38 = sbr.rel (0) target = $region33
    $region32: #{_forward_impl.1} parent=1 // pred_region
      %39 = dma.done [#allocation3], 7168
    $region33: #{_forward_impl.1} parent=1 // pred_fallthru
      _
    %v41 = vld [vmem:[%s0] sm:$0xff]
    %v42 = vld [vmem:[%s0 + $0x8] sm:$0xff]
    %v43 = vld [vmem:[%s0 + $0x10] sm:$0xff]
    %v44 = vld [vmem:[%s0 + $0x18] sm:$0xff]
    %v45 = vld [vmem:[%s0 + $0x20] sm:$0xff]
    %v46 = vld [vmem:[%s0 + $0x28] sm:$0xff]
    %v47 = vld [vmem:[%s0 + $0x30] sm:$0xff]
    %v48 = vpack.c.bf16 %v41, %v41
    %v49 = vpack.c.bf16 %v42, %v42
    %v50 = vpack.c.bf16 %v43, %v43
    %v51 = vpack.c.bf16 %v44, %v44
    %v52 = vpack.c.bf16 %v45, %v45
    %v53 = vpack.c.bf16 %v46, %v46
    %v54 = vpack.c.bf16 %v47, %v47
    %v55 = vld [vmem:[#allocation2] sm:$0xf]
    %v56 = vld [vmem:[#allocation2 + $0x4] sm:$0xf]
    %v57 = vld [vmem:[#allocation2 + $0x8] sm:$0xf]
    %v58 = vld [vmem:[#allocation2 + $0xc] sm:$0xf]
    %v59 = vld [vmem:[#allocation2 + $0x10] sm:$0xf]
    %v60 = vld [vmem:[#allocation2 + $0x14] sm:$0xf]
    %v61 = vld [vmem:[#allocation2 + $0x18] sm:$0xf]
    %v62 = vld [vmem:[#allocation2 + $0x1c] sm:$0xf]
    %v63 = vld [vmem:[#allocation2 + $0x20] sm:$0xf]
    %v64 = vld [vmem:[#allocation2 + $0x24] sm:$0xf]
    %v65 = vld [vmem:[#allocation2 + $0x28] sm:$0xf]
    %v66 = vld [vmem:[#allocation2 + $0x2c] sm:$0xf]
    %v67 = vld [vmem:[#allocation2 + $0x30] sm:$0xf]
    %v68 = vld [vmem:[#allocation2 + $0x34] sm:$0xf]
    %v69 = vld [vmem:[#allocation2 + $0x38] sm:$0xf]
    %v70 = vld [vmem:[#allocation2 + $0x3c] sm:$0xf]
    %v71 = vld [vmem:[#allocation2 + $0x40] sm:$0xf]
    %v72 = vld [vmem:[#allocation2 + $0x44] sm:$0xf]
    %v73 = vld [vmem:[#allocation2 + $0x48] sm:$0xf]
    %v74 = vld [vmem:[#allocation2 + $0x4c] sm:$0xf]
    %v75 = vld [vmem:[#allocation2 + $0x50] sm:$0xf]
    %v76 = vld [vmem:[#allocation2 + $0x54] sm:$0xf]
    %v77 = vld [vmem:[#allocation2 + $0x58] sm:$0xf]
    %v78 = vld [vmem:[#allocation2 + $0x5c] sm:$0xf]
    %v79 = vld [vmem:[#allocation2 + $0x60] sm:$0xf]
    %v80 = vld [vmem:[#allocation2 + $0x64] sm:$0xf]
    %v81 = vld [vmem:[#allocation2 + $0x68] sm:$0xf]
    %v82 = vld [vmem:[#allocation2 + $0x6c] sm:$0xf]
    %v83 = vld [vmem:[#allocation2 + $0x70] sm:$0xf]
    %v84 = vld [vmem:[#allocation2 + $0x74] sm:$0xf]
    %v85 = vld [vmem:[#allocation2 + $0x78] sm:$0xf]
    %v86 = vld [vmem:[#allocation2 + $0x7c] sm:$0xf]
    %v87 = vld [vmem:[#allocation2 + $0x80] sm:$0xf]
    %v88 = vld [vmem:[#allocation2 + $0x84] sm:$0xf]
    %v89 = vld [vmem:[#allocation2 + $0x88] sm:$0xf]
    %v90 = vld [vmem:[#allocation2 + $0x8c] sm:$0xf]
    %v91 = vld [vmem:[#allocation2 + $0x90] sm:$0xf]
    %v92 = vld [vmem:[#allocation2 + $0x94] sm:$0xf]
    %v93 = vld [vmem:[#allocation2 + $0x98] sm:$0xf]
    %v94 = vld [vmem:[#allocation2 + $0x9c] sm:$0xf]
    %v95 = vld [vmem:[#allocation2 + $0xa0] sm:$0xf]
    %v96 = vld [vmem:[#allocation2 + $0xa4] sm:$0xf]
    %v97 = vld [vmem:[#allocation2 + $0xa8] sm:$0xf]
    %v98 = vld [vmem:[#allocation2 + $0xac] sm:$0xf]
    %v99 = vld [vmem:[#allocation2 + $0xb0] sm:$0xf]
    %v100 = vld [vmem:[#allocation2 + $0xb4] sm:$0xf]
    %v101 = vld [vmem:[#allocation2 + $0xb8] sm:$0xf]
    %v102 = vld [vmem:[#allocation2 + $0xbc] sm:$0xf]
    %v103 = vld [vmem:[#allocation2 + $0xc0] sm:$0xf]
    %v104 = vld [vmem:[#allocation2 + $0xc4] sm:$0xf]
    %v105 = vld [vmem:[#allocation2 + $0xc8] sm:$0xf]
    %v106 = vld [vmem:[#allocation2 + $0xcc] sm:$0xf]
    %v107 = vld [vmem:[#allocation2 + $0xd0] sm:$0xf]
    %v108 = vld [vmem:[#allocation2 + $0xd4] sm:$0xf]
    %v109 = vld [vmem:[#allocation2 + $0xd8] sm:$0xf]
    %v110 = vld [vmem:[#allocation2 + $0xdc] sm:$0xf]
    %v111 = vld [vmem:[#allocation2 + $0xe0] sm:$0xf]
    %v112 = vld [vmem:[#allocation2 + $0xe4] sm:$0xf]
    %v113 = vld [vmem:[#allocation2 + $0xe8] sm:$0xf]
    %v114 = vld [vmem:[#allocation2 + $0xec] sm:$0xf]
    %v115 = vld [vmem:[#allocation2 + $0xf0] sm:$0xf]
    %v116 = vld [vmem:[#allocation2 + $0xf4] sm:$0xf]
    %v117 = vld [vmem:[#allocation2 + $0xf8] sm:$0xf]
    %v118 = vld [vmem:[#allocation2 + $0xfc] sm:$0xf]
    %v119 = vld [vmem:[#allocation2 + $0x100] sm:$0xf]
    %v120 = vld [vmem:[#allocation2 + $0x104] sm:$0xf]
    %v121 = vld [vmem:[#allocation2 + $0x108] sm:$0xf]
    %v122 = vld [vmem:[#allocation2 + $0x10c] sm:$0xf]
    %v123 = vld [vmem:[#allocation2 + $0x110] sm:$0xf]
    %v124 = vld [vmem:[#allocation2 + $0x114] sm:$0xf]
    %v125 = vld [vmem:[#allocation2 + $0x118] sm:$0xf]
    %v126 = vld [vmem:[#allocation2 + $0x11c] sm:$0xf]
    %v127 = vld [vmem:[#allocation2 + $0x120] sm:$0xf]
    %v128 = vld [vmem:[#allocation2 + $0x124] sm:$0xf]
    %v129 = vld [vmem:[#allocation2 + $0x128] sm:$0xf]
    %v130 = vld [vmem:[#allocation2 + $0x12c] sm:$0xf]
    %v131 = vld [vmem:[#allocation2 + $0x130] sm:$0xf]
    %v132 = vld [vmem:[#allocation2 + $0x134] sm:$0xf]
    %v133 = vld [vmem:[#allocation2 + $0x138] sm:$0xf]
    %v134 = vld [vmem:[#allocation2 + $0x13c] sm:$0xf]
    %v135 = vld [vmem:[#allocation2 + $0x140] sm:$0xf]
    %v136 = vld [vmem:[#allocation2 + $0x144] sm:$0xf]
    %v137 = vld [vmem:[#allocation2 + $0x148] sm:$0xf]
    %v138 = vld [vmem:[#allocation2 + $0x14c] sm:$0xf]
    %v139 = vld [vmem:[#allocation2 + $0x150] sm:$0xf]
    %v140 = vld [vmem:[#allocation2 + $0x154] sm:$0xf]
    %v141 = vld [vmem:[#allocation2 + $0x158] sm:$0xf]
    %v142 = vld [vmem:[#allocation2 + $0x15c] sm:$0xf]
    %v143 = vld [vmem:[#allocation2 + $0x160] sm:$0xf]
    %v144 = vld [vmem:[#allocation2 + $0x164] sm:$0xf]
    %v145 = vld [vmem:[#allocation2 + $0x168] sm:$0xf]
    %v146 = vld [vmem:[#allocation2 + $0x16c] sm:$0xf]
    %v147 = vld [vmem:[#allocation2 + $0x170] sm:$0xf]
    %v148 = vld [vmem:[#allocation2 + $0x174] sm:$0xf]
    %v149 = vld [vmem:[#allocation2 + $0x178] sm:$0xf]
    %v150 = vld [vmem:[#allocation2 + $0x17c] sm:$0xf]
    %v151 = vld [vmem:[#allocation2 + $0x180] sm:$0xf]
    %v152 = vld [vmem:[#allocation2 + $0x184] sm:$0xf]
    %v153 = vld [vmem:[#allocation2 + $0x188] sm:$0xf]
    %v154 = vld [vmem:[#allocation2 + $0x18c] sm:$0xf]
    %v155 = vld [vmem:[#allocation2 + $0x190] sm:$0xf]
    %v156 = vld [vmem:[#allocation2 + $0x194] sm:$0xf]
    %v157 = vld [vmem:[#allocation2 + $0x198] sm:$0xf]
    %v158 = vld [vmem:[#allocation2 + $0x19c] sm:$0xf]
    %v159 = vld [vmem:[#allocation2 + $0x1a0] sm:$0xf]
    %v160 = vld [vmem:[#allocation2 + $0x1a4] sm:$0xf]
    %v161 = vld [vmem:[#allocation2 + $0x1a8] sm:$0xf]
    %v162 = vld [vmem:[#allocation2 + $0x1ac] sm:$0xf]
    %v163 = vld [vmem:[#allocation2 + $0x1b0] sm:$0xf]
    %v164 = vld [vmem:[#allocation2 + $0x1b4] sm:$0xf]
    %v165 = vld [vmem:[#allocation2 + $0x1b8] sm:$0xf]
    %v166 = vld [vmem:[#allocation2 + $0x1bc] sm:$0xf]
    %v167 = vld [vmem:[%s2] sm:$0x1]
    %v169 = vlaneseq
    %v170 = vshrl.u32 %v169, 7
    %v171 = vsub.s32 0, %v170
    %v172 = vrot.slane %v167, %v171
    %v286 = vunpack.c.l.b16 %v55
    %v287 = vunpack.c.l.b16 %v56
    %v288 = vunpack.c.l.b16 %v57
    %v289 = vunpack.c.l.b16 %v58
    %v290 = vunpack.c.l.b16 %v59
    %v291 = vunpack.c.l.b16 %v60
    %v292 = vunpack.c.l.b16 %v61
    %v293 = vunpack.c.l.b16 %v62
    %v294 = vunpack.c.l.b16 %v63
    %v295 = vunpack.c.l.b16 %v64
    %v296 = vunpack.c.l.b16 %v65
    %v297 = vunpack.c.l.b16 %v66
    %v298 = vunpack.c.l.b16 %v67
    %v299 = vunpack.c.l.b16 %v68
    %v300 = vunpack.c.l.b16 %v69
    %v301 = vunpack.c.l.b16 %v70
    %v302 = vunpack.c.l.b16 %v71
    %v303 = vunpack.c.l.b16 %v72
    %v304 = vunpack.c.l.b16 %v73
    %v305 = vunpack.c.l.b16 %v74
    %v306 = vunpack.c.l.b16 %v75
    %v307 = vunpack.c.l.b16 %v76
    %v308 = vunpack.c.l.b16 %v77
    %v309 = vunpack.c.l.b16 %v78
    %v310 = vunpack.c.l.b16 %v79
    %v311 = vunpack.c.l.b16 %v80
    %v312 = vunpack.c.l.b16 %v81
    %v313 = vunpack.c.l.b16 %v82
    %v314 = vunpack.c.l.b16 %v83
    %v315 = vunpack.c.l.b16 %v84
    %v316 = vunpack.c.l.b16 %v85
    %v317 = vunpack.c.l.b16 %v86
    %v318 = vunpack.c.l.b16 %v87
    %v319 = vunpack.c.l.b16 %v88
    %v320 = vunpack.c.l.b16 %v89
    %v321 = vunpack.c.l.b16 %v90
    %v322 = vunpack.c.l.b16 %v91
    %v323 = vunpack.c.l.b16 %v92
    %v324 = vunpack.c.l.b16 %v93
    %v325 = vunpack.c.l.b16 %v94
    %v326 = vunpack.c.l.b16 %v95
    %v327 = vunpack.c.l.b16 %v96
    %v328 = vunpack.c.l.b16 %v97
    %v329 = vunpack.c.l.b16 %v98
    %v330 = vunpack.c.l.b16 %v99
    %v331 = vunpack.c.l.b16 %v100
    %v332 = vunpack.c.l.b16 %v101
    %v333 = vunpack.c.l.b16 %v102
    %v334 = vunpack.c.l.b16 %v103
    %v335 = vunpack.c.l.b16 %v104
    %v336 = vunpack.c.l.b16 %v105
    %v337 = vunpack.c.l.b16 %v106
    %v338 = vunpack.c.l.b16 %v107
    %v339 = vunpack.c.l.b16 %v108
    %v340 = vunpack.c.l.b16 %v109
    %v341 = vunpack.c.l.b16 %v110
    %v342 = vunpack.c.l.b16 %v111
    %v343 = vunpack.c.l.b16 %v112
    %v344 = vunpack.c.l.b16 %v113
    %v345 = vunpack.c.l.b16 %v114
    %v346 = vunpack.c.l.b16 %v115
    %v347 = vunpack.c.l.b16 %v116
    %v348 = vunpack.c.l.b16 %v117
    %v349 = vunpack.c.l.b16 %v118
    %v350 = vunpack.c.l.b16 %v119
    %v351 = vunpack.c.l.b16 %v120
    %v352 = vunpack.c.l.b16 %v121
    %v353 = vunpack.c.l.b16 %v122
    %v354 = vunpack.c.l.b16 %v123
    %v355 = vunpack.c.l.b16 %v124
    %v356 = vunpack.c.l.b16 %v125
    %v357 = vunpack.c.l.b16 %v126
    %v358 = vunpack.c.l.b16 %v127
    %v359 = vunpack.c.l.b16 %v128
    %v360 = vunpack.c.l.b16 %v129
    %v361 = vunpack.c.l.b16 %v130
    %v362 = vunpack.c.l.b16 %v131
    %v363 = vunpack.c.l.b16 %v132
    %v364 = vunpack.c.l.b16 %v133
    %v365 = vunpack.c.l.b16 %v134
    %v366 = vunpack.c.l.b16 %v135
    %v367 = vunpack.c.l.b16 %v136
    %v368 = vunpack.c.l.b16 %v137
    %v369 = vunpack.c.l.b16 %v138
    %v370 = vunpack.c.l.b16 %v139
    %v371 = vunpack.c.l.b16 %v140
    %v372 = vunpack.c.l.b16 %v141
    %v373 = vunpack.c.l.b16 %v142
    %v374 = vunpack.c.l.b16 %v143
    %v375 = vunpack.c.l.b16 %v144
    %v376 = vunpack.c.l.b16 %v145
    %v377 = vunpack.c.l.b16 %v146
    %v378 = vunpack.c.l.b16 %v147
    %v379 = vunpack.c.l.b16 %v148
    %v380 = vunpack.c.l.b16 %v149
    %v381 = vunpack.c.l.b16 %v150
    %v382 = vunpack.c.l.b16 %v151
    %v383 = vunpack.c.l.b16 %v152
    %v384 = vunpack.c.l.b16 %v153
    %v385 = vunpack.c.l.b16 %v154
    %v386 = vunpack.c.l.b16 %v155
    %v387 = vunpack.c.l.b16 %v156
    %v388 = vunpack.c.l.b16 %v157
    %v389 = vunpack.c.l.b16 %v158
    %v390 = vunpack.c.l.b16 %v159
    %v391 = vunpack.c.l.b16 %v160
    %v392 = vunpack.c.l.b16 %v161
    %v393 = vunpack.c.l.b16 %v162
    %v394 = vunpack.c.l.b16 %v163
    %v395 = vunpack.c.l.b16 %v164
    %v396 = vunpack.c.l.b16 %v165
    %v397 = vunpack.c.l.b16 %v166
    %v398 = vpack.c.b16 %v287, %v286
    %v399 = vpack.c.b16 %v289, %v288
    %v400 = vpack.c.b16 %v291, %v290
    %v401 = vpack.c.b16 %v293, %v292
    %v402 = vpack.c.b16 %v295, %v294
    %v403 = vpack.c.b16 %v297, %v296
    %v404 = vpack.c.b16 %v299, %v298
    %v405 = vpack.c.b16 %v301, %v300
    %v406 = vpack.c.b16 %v303, %v302
    %v407 = vpack.c.b16 %v305, %v304
    %v408 = vpack.c.b16 %v307, %v306
    %v409 = vpack.c.b16 %v309, %v308
    %v410 = vpack.c.b16 %v311, %v310
    %v411 = vpack.c.b16 %v313, %v312
    %v412 = vpack.c.b16 %v315, %v314
    %v413 = vpack.c.b16 %v317, %v316
    %v414 = vpack.c.b16 %v319, %v318
    %v415 = vpack.c.b16 %v321, %v320
    %v416 = vpack.c.b16 %v323, %v322
    %v417 = vpack.c.b16 %v325, %v324
    %v418 = vpack.c.b16 %v327, %v326
    %v419 = vpack.c.b16 %v329, %v328
    %v420 = vpack.c.b16 %v331, %v330
    %v421 = vpack.c.b16 %v333, %v332
    %v422 = vpack.c.b16 %v335, %v334
    %v423 = vpack.c.b16 %v337, %v336
    %v424 = vpack.c.b16 %v339, %v338
    %v425 = vpack.c.b16 %v341, %v340
    %v426 = vpack.c.b16 %v343, %v342
    %v427 = vpack.c.b16 %v345, %v344
    %v428 = vpack.c.b16 %v347, %v346
    %v429 = vpack.c.b16 %v349, %v348
    %v430 = vpack.c.b16 %v351, %v350
    %v431 = vpack.c.b16 %v353, %v352
    %v432 = vpack.c.b16 %v355, %v354
    %v433 = vpack.c.b16 %v357, %v356
    %v434 = vpack.c.b16 %v359, %v358
    %v435 = vpack.c.b16 %v361, %v360
    %v436 = vpack.c.b16 %v363, %v362
    %v437 = vpack.c.b16 %v365, %v364
    %v438 = vpack.c.b16 %v367, %v366
    %v439 = vpack.c.b16 %v369, %v368
    %v440 = vpack.c.b16 %v371, %v370
    %v441 = vpack.c.b16 %v373, %v372
    %v442 = vpack.c.b16 %v375, %v374
    %v443 = vpack.c.b16 %v377, %v376
    %v444 = vpack.c.b16 %v379, %v378
    %v445 = vpack.c.b16 %v381, %v380
    %v446 = vpack.c.b16 %v383, %v382
    %v447 = vpack.c.b16 %v385, %v384
    %v448 = vpack.c.b16 %v387, %v386
    %v449 = vpack.c.b16 %v389, %v388
    %v450 = vpack.c.b16 %v391, %v390
    %v451 = vpack.c.b16 %v393, %v392
    %v452 = vpack.c.b16 %v395, %v394
    %v453 = vpack.c.b16 %v397, %v396
    %510 = vmatprep.subr.bf16.mxu0 0
    %511 = vmatpush1.bf16.msra.mxu0 %v398
    %512 = vmatprep.subr.bf16.mxu0 0
    %513 = vmatpush1.bf16.msra.mxu0 %v399
    %514 = vmatprep.subr.bf16.mxu0 0
    %515 = vmatpush1.bf16.msra.mxu0 %v400
    %516 = vmatprep.subr.bf16.mxu0 0
    %517 = vmatpush1.bf16.msra.mxu0 %v401
    %518 = vmatprep.subr.bf16.mxu0 0
    %519 = vmatpush1.bf16.msra.mxu0 %v402
    %520 = vmatprep.subr.bf16.mxu0 0
    %521 = vmatpush1.bf16.msra.mxu0 %v403
    %522 = vmatprep.subr.bf16.mxu0 0
    %523 = vmatpush1.bf16.msra.mxu0 %v404
    %524 = vmatprep.subr.bf16.mxu0 0
    %525 = vmatpush1.bf16.msra.mxu0 %v405
    %526 = vmatprep.subr.bf16.mxu0 0
    %527 = vmatpush1.bf16.msra.mxu0 %v406
    %528 = vmatprep.subr.bf16.mxu0 0
    %529 = vmatpush1.bf16.msra.mxu0 %v407
    %530 = vmatprep.subr.bf16.mxu0 0
    %531 = vmatpush1.bf16.msra.mxu0 %v408
    %532 = vmatprep.subr.bf16.mxu0 0
    %533 = vmatpush1.bf16.msra.mxu0 %v409
    %534 = vmatprep.subr.bf16.mxu0 0
    %535 = vmatpush1.bf16.msra.mxu0 %v410
    %536 = vmatprep.subr.bf16.mxu0 0
    %537 = vmatpush1.bf16.msra.mxu0 %v411
    %538 = vmatprep.subr.bf16.mxu0 0
    %539 = vmatpush1.bf16.msra.mxu0 %v412
    %540 = vmatprep.subr.bf16.mxu0 0
    %541 = vmatpush1.bf16.msra.mxu0 %v413
    %542 = vmatprep.mubr.bf16.mxu0 %v49
    %543 = vmatmul.mubr.bf16.gmra.mrb[0].mxu0 %v48
    %v544 = vpop.f32.mrb[0].mxu0
    %v545 = vadd.f32 %v172, %v544
    %v546 = vpop.f32.mrb[0].mxu0
    %v547 = vpop.f32.mrb[0].mxu0
    %v548 = vpop.f32.mrb[0].mxu0
    %549 = vdwg.mxu0
    %550 = vmatprep.subr.bf16.mxu0 0
    %551 = vmatpush1.bf16.msra.mxu0 %v414
    %552 = vmatprep.subr.bf16.mxu0 0
    %553 = vmatpush1.bf16.msra.mxu0 %v415
    %554 = vmatprep.subr.bf16.mxu0 0
    %555 = vmatpush1.bf16.msra.mxu0 %v416
    %556 = vmatprep.subr.bf16.mxu0 0
    %557 = vmatpush1.bf16.msra.mxu0 %v417
    %558 = vmatprep.subr.bf16.mxu0 0
    %559 = vmatpush1.bf16.msra.mxu0 %v418
    %560 = vmatprep.subr.bf16.mxu0 0
    %561 = vmatpush1.bf16.msra.mxu0 %v419
    %562 = vmatprep.subr.bf16.mxu0 0
    %563 = vmatpush1.bf16.msra.mxu0 %v420
    %564 = vmatprep.subr.bf16.mxu0 0
    %565 = vmatpush1.bf16.msra.mxu0 %v421
    %566 = vmatprep.subr.bf16.mxu0 0
    %567 = vmatpush1.bf16.msra.mxu0 %v422
    %568 = vmatprep.subr.bf16.mxu0 0
    %569 = vmatpush1.bf16.msra.mxu0 %v423
    %570 = vmatprep.subr.bf16.mxu0 0
    %571 = vmatpush1.bf16.msra.mxu0 %v424
    %572 = vmatprep.subr.bf16.mxu0 0
    %573 = vmatpush1.bf16.msra.mxu0 %v425
    %574 = vmatprep.subr.bf16.mxu0 0
    %575 = vmatpush1.bf16.msra.mxu0 %v426
    %576 = vmatprep.subr.bf16.mxu0 0
    %577 = vmatpush1.bf16.msra.mxu0 %v427
    %578 = vmatprep.subr.bf16.mxu0 0
    %579 = vmatpush1.bf16.msra.mxu0 %v428
    %580 = vmatprep.subr.bf16.mxu0 0
    %581 = vmatpush1.bf16.msra.mxu0 %v429
    %582 = vmatprep.mubr.bf16.mxu0 %v51
    %583 = vmatmul.mubr.bf16.gmra.mrb[0].mxu0 %v50
    %v584 = vpop.f32.mrb[0].mxu0
    %v585 = vadd.f32 %v545, %v584
    %v586 = vpop.f32.mrb[0].mxu0
    %v587 = vpop.f32.mrb[0].mxu0
    %v588 = vpop.f32.mrb[0].mxu0
    %589 = vdwg.mxu0
    %590 = vmatprep.subr.bf16.mxu0 0
    %591 = vmatpush1.bf16.msra.mxu0 %v430
    %592 = vmatprep.subr.bf16.mxu0 0
    %593 = vmatpush1.bf16.msra.mxu0 %v431
    %594 = vmatprep.subr.bf16.mxu0 0
    %595 = vmatpush1.bf16.msra.mxu0 %v432
    %596 = vmatprep.subr.bf16.mxu0 0
    %597 = vmatpush1.bf16.msra.mxu0 %v433
    %598 = vmatprep.subr.bf16.mxu0 0
    %599 = vmatpush1.bf16.msra.mxu0 %v434
    %600 = vmatprep.subr.bf16.mxu0 0
    %601 = vmatpush1.bf16.msra.mxu0 %v435
    %602 = vmatprep.subr.bf16.mxu0 0
    %603 = vmatpush1.bf16.msra.mxu0 %v436
    %604 = vmatprep.subr.bf16.mxu0 0
    %605 = vmatpush1.bf16.msra.mxu0 %v437
    %606 = vmatprep.subr.bf16.mxu0 0
    %607 = vmatpush1.bf16.msra.mxu0 %v438
    %608 = vmatprep.subr.bf16.mxu0 0
    %609 = vmatpush1.bf16.msra.mxu0 %v439
    %610 = vmatprep.subr.bf16.mxu0 0
    %611 = vmatpush1.bf16.msra.mxu0 %v440
    %612 = vmatprep.subr.bf16.mxu0 0
    %613 = vmatpush1.bf16.msra.mxu0 %v441
    %614 = vmatprep.subr.bf16.mxu0 0
    %615 = vmatpush1.bf16.msra.mxu0 %v442
    %616 = vmatprep.subr.bf16.mxu0 0
    %617 = vmatpush1.bf16.msra.mxu0 %v443
    %618 = vmatprep.subr.bf16.mxu0 0
    %619 = vmatpush1.bf16.msra.mxu0 %v444
    %620 = vmatprep.subr.bf16.mxu0 0
    %621 = vmatpush1.bf16.msra.mxu0 %v445
    %622 = vmatprep.mubr.bf16.mxu0 %v53
    %623 = vmatmul.mubr.bf16.gmra.mrb[0].mxu0 %v52
    %v624 = vpop.f32.mrb[0].mxu0
    %v625 = vadd.f32 %v585, %v624
    %v626 = vpop.f32.mrb[0].mxu0
    %v627 = vpop.f32.mrb[0].mxu0
    %v628 = vpop.f32.mrb[0].mxu0
    %629 = vdwg.mxu0
    %630 = vmatprep.subr.bf16.mxu0 0
    %631 = vmatpush1.bf16.msra.mxu0 %v446
    %632 = vmatprep.subr.bf16.mxu0 0
    %633 = vmatpush1.bf16.msra.mxu0 %v447
    %634 = vmatprep.subr.bf16.mxu0 0
    %635 = vmatpush1.bf16.msra.mxu0 %v448
    %636 = vmatprep.subr.bf16.mxu0 0
    %637 = vmatpush1.bf16.msra.mxu0 %v449
    %638 = vmatprep.subr.bf16.mxu0 0
    %639 = vmatpush1.bf16.msra.mxu0 %v450
    %640 = vmatprep.subr.bf16.mxu0 0
    %641 = vmatpush1.bf16.msra.mxu0 %v451
    %642 = vmatprep.subr.bf16.mxu0 0
    %643 = vmatpush1.bf16.msra.mxu0 %v452
    %644 = vmatprep.subr.bf16.mxu0 0
    %645 = vmatpush1.bf16.msra.mxu0 %v453
    %646 = vmatprep.subr.bf16.mxu0 0
    %647 = vmatpush1.bf16.msra.mxu0 0
    %648 = vmatprep.subr.bf16.mxu0 0
    %649 = vmatpush1.bf16.msra.mxu0 0
    %650 = vmatprep.subr.bf16.mxu0 0
    %651 = vmatpush1.bf16.msra.mxu0 0
    %652 = vmatprep.subr.bf16.mxu0 0
    %653 = vmatpush1.bf16.msra.mxu0 0
    %654 = vmatprep.subr.bf16.mxu0 0
    %655 = vmatpush1.bf16.msra.mxu0 0
    %656 = vmatprep.subr.bf16.mxu0 0
    %657 = vmatpush1.bf16.msra.mxu0 0
    %658 = vmatprep.subr.bf16.mxu0 0
    %659 = vmatpush1.bf16.msra.mxu0 0
    %660 = vmatprep.subr.bf16.mxu0 0
    %661 = vmatpush1.bf16.msra.mxu0 0
    %662 = vmatprep.mubr.bf16.mxu0 0
    %663 = vmatmul.mubr.bf16.gmra.mrb[0].mxu0 %v54
    %v664 = vpop.f32.mrb[0].mxu0
    %v665 = vadd.f32 %v625, %v664
    %v666 = vpop.f32.mrb[0].mxu0
    %v667 = vpop.f32.mrb[0].mxu0
    %v668 = vpop.f32.mrb[0].mxu0
    %669 = vdwg.mxu0
    %v670 = vmax.f32 %v665, 0.0
    %v671 = vpack.c.bf16 %v670, %v670
    %v672 = vld [vmem:[%s3] sm:$0xf]
    %v673 = vld [vmem:[%s3 + $0x4] sm:$0xf]
    %v674 = vld [vmem:[%s3 + $0x8] sm:$0xf]
    %v675 = vld [vmem:[%s3 + $0xc] sm:$0xf]
    %v676 = vld [vmem:[%s3 + $0x10] sm:$0xf]
    %v677 = vld [vmem:[%s3 + $0x14] sm:$0xf]
    %v678 = vld [vmem:[%s3 + $0x18] sm:$0xf]
    %v679 = vld [vmem:[%s3 + $0x1c] sm:$0xf]
    %v680 = vld [vmem:[%s3 + $0x20] sm:$0xf]
    %v681 = vld [vmem:[%s3 + $0x24] sm:$0xf]
    %v682 = vld [vmem:[%s3 + $0x28] sm:$0xf]
    %v683 = vld [vmem:[%s3 + $0x2c] sm:$0xf]
    %v684 = vld [vmem:[%s3 + $0x30] sm:$0xf]
    %v685 = vld [vmem:[%s3 + $0x34] sm:$0xf]
    %v686 = vld [vmem:[%s3 + $0x38] sm:$0xf]
    %v687 = vld [vmem:[%s3 + $0x3c] sm:$0xf]
    %v688 = vld [vmem:[%s4] sm:$0x1]
    %v690 = vlaneseq
    %v691 = vshrl.u32 %v690, 7
    %v692 = vsub.s32 0, %v691
    %v693 = vrot.slane %v688, %v692
    %v711 = vunpack.c.l.b16 %v672
    %v712 = vunpack.c.l.b16 %v673
    %v713 = vunpack.c.l.b16 %v674
    %v714 = vunpack.c.l.b16 %v675
    %v715 = vunpack.c.l.b16 %v676
    %v716 = vunpack.c.l.b16 %v677
    %v717 = vunpack.c.l.b16 %v678
    %v718 = vunpack.c.l.b16 %v679
    %v719 = vunpack.c.l.b16 %v680
    %v720 = vunpack.c.l.b16 %v681
    %v721 = vunpack.c.l.b16 %v682
    %v722 = vunpack.c.l.b16 %v683
    %v723 = vunpack.c.l.b16 %v684
    %v724 = vunpack.c.l.b16 %v685
    %v725 = vunpack.c.l.b16 %v686
    %v726 = vunpack.c.l.b16 %v687
    %v727 = vpack.c.b16 %v712, %v711
    %v728 = vpack.c.b16 %v714, %v713
    %v729 = vpack.c.b16 %v716, %v715
    %v730 = vpack.c.b16 %v718, %v717
    %v731 = vpack.c.b16 %v720, %v719
    %v732 = vpack.c.b16 %v722, %v721
    %v733 = vpack.c.b16 %v724, %v723
    %v734 = vpack.c.b16 %v726, %v725
    %743 = vmatprep.subr.bf16.mxu0 0
    %744 = vmatpush1.bf16.msra.mxu0 %v727
    %745 = vmatprep.subr.bf16.mxu0 0
    %746 = vmatpush1.bf16.msra.mxu0 %v728
    %747 = vmatprep.subr.bf16.mxu0 0
    %748 = vmatpush1.bf16.msra.mxu0 %v729
    %749 = vmatprep.subr.bf16.mxu0 0
    %750 = vmatpush1.bf16.msra.mxu0 %v730
    %751 = vmatprep.subr.bf16.mxu0 0
    %752 = vmatpush1.bf16.msra.mxu0 %v731
    %753 = vmatprep.subr.bf16.mxu0 0
    %754 = vmatpush1.bf16.msra.mxu0 %v732
    %755 = vmatprep.subr.bf16.mxu0 0
    %756 = vmatpush1.bf16.msra.mxu0 %v733
    %757 = vmatprep.subr.bf16.mxu0 0
    %758 = vmatpush1.bf16.msra.mxu0 %v734
    %759 = vmatprep.subr.bf16.mxu0 0
    %760 = vmatpush1.bf16.msra.mxu0 0
    %761 = vmatprep.subr.bf16.mxu0 0
    %762 = vmatpush1.bf16.msra.mxu0 0
    %763 = vmatprep.subr.bf16.mxu0 0
    %764 = vmatpush1.bf16.msra.mxu0 0
    %765 = vmatprep.subr.bf16.mxu0 0
    %766 = vmatpush1.bf16.msra.mxu0 0
    %767 = vmatprep.subr.bf16.mxu0 0
    %768 = vmatpush1.bf16.msra.mxu0 0
    %769 = vmatprep.subr.bf16.mxu0 0
    %770 = vmatpush1.bf16.msra.mxu0 0
    %771 = vmatprep.subr.bf16.mxu0 0
    %772 = vmatpush1.bf16.msra.mxu0 0
    %773 = vmatprep.subr.bf16.mxu0 0
    %774 = vmatpush1.bf16.msra.mxu0 0
    %775 = vmatprep.mubr.bf16.mxu0 0
    %776 = vmatmul.mubr.bf16.gmra.mrb[0].mxu0 %v671
    %v777 = vpop.f32.mrb[0].mxu0
    %v778 = vadd.f32 %v693, %v777
    %v779 = vpop.f32.mrb[0].mxu0
    %v780 = vpop.f32.mrb[0].mxu0
    %v781 = vpop.f32.mrb[0].mxu0
    %782 = vdwg.mxu0
    %v783 = vmax.f32 %v778, 0.0
    %v784 = vpack.c.bf16 %v783, %v783
    %v785 = vld [vmem:[%s5] sm:$0xf]
    %v786 = vld [vmem:[%s5 + $0x4] sm:$0xf]
    %v787 = vld [vmem:[%s5 + $0x8] sm:$0xf]
    %v788 = vld [vmem:[%s5 + $0xc] sm:$0xf]
    %v789 = vld [vmem:[%s5 + $0x10] sm:$0xf]
    %v790 = vld [vmem:[%s5 + $0x14] sm:$0xf]
    %v791 = vld [vmem:[%s5 + $0x18] sm:$0xf]
    %v792 = vld [vmem:[%s5 + $0x1c] sm:$0xf]
    %v793 = vld [vmem:[%s5 + $0x20] sm:$0xf]
    %v794 = vld [vmem:[%s5 + $0x24] sm:$0xf]
    %v795 = vld [vmem:[%s5 + $0x28] sm:$0xf]
    %v796 = vld [vmem:[%s5 + $0x2c] sm:$0xf]
    %v797 = vld [vmem:[%s5 + $0x30] sm:$0xf]
    %v798 = vld [vmem:[%s5 + $0x34] sm:$0xf]
    %v799 = vld [vmem:[%s5 + $0x38] sm:$0xf]
    %v800 = vld [vmem:[%s5 + $0x3c] sm:$0xf]
    %v801 = vld [vmem:[%s6] sm:$0x1]
    %v803 = vlaneseq
    %v804 = vshrl.u32 %v803, 7
    %v805 = vsub.s32 0, %v804
    %v806 = vrot.slane %v801, %v805
    %v824 = vunpack.c.l.b16 %v785
    %v825 = vunpack.c.l.b16 %v786
    %v826 = vunpack.c.l.b16 %v787
    %v827 = vunpack.c.l.b16 %v788
    %v828 = vunpack.c.l.b16 %v789
    %v829 = vunpack.c.l.b16 %v790
    %v830 = vunpack.c.l.b16 %v791
    %v831 = vunpack.c.l.b16 %v792
    %v832 = vunpack.c.l.b16 %v793
    %v833 = vunpack.c.l.b16 %v794
    %v834 = vunpack.c.l.b16 %v795
    %v835 = vunpack.c.l.b16 %v796
    %v836 = vunpack.c.l.b16 %v797
    %v837 = vunpack.c.l.b16 %v798
    %v838 = vunpack.c.l.b16 %v799
    %v839 = vunpack.c.l.b16 %v800
    %v840 = vpack.c.b16 %v825, %v824
    %v841 = vpack.c.b16 %v827, %v826
    %v842 = vpack.c.b16 %v829, %v828
    %v843 = vpack.c.b16 %v831, %v830
    %v844 = vpack.c.b16 %v833, %v832
    %v845 = vpack.c.b16 %v835, %v834
    %v846 = vpack.c.b16 %v837, %v836
    %v847 = vpack.c.b16 %v839, %v838
    %856 = vmatprep.subr.bf16.mxu0 0
    %857 = vmatpush1.bf16.msra.mxu0 %v840
    %858 = vmatprep.subr.bf16.mxu0 0
    %859 = vmatpush1.bf16.msra.mxu0 %v841
    %860 = vmatprep.subr.bf16.mxu0 0
    %861 = vmatpush1.bf16.msra.mxu0 %v842
    %862 = vmatprep.subr.bf16.mxu0 0
    %863 = vmatpush1.bf16.msra.mxu0 %v843
    %864 = vmatprep.subr.bf16.mxu0 0
    %865 = vmatpush1.bf16.msra.mxu0 %v844
    %866 = vmatprep.subr.bf16.mxu0 0
    %867 = vmatpush1.bf16.msra.mxu0 %v845
    %868 = vmatprep.subr.bf16.mxu0 0
    %869 = vmatpush1.bf16.msra.mxu0 %v846
    %870 = vmatprep.subr.bf16.mxu0 0
    %871 = vmatpush1.bf16.msra.mxu0 %v847
    %872 = vmatprep.subr.bf16.mxu0 0
    %873 = vmatpush1.bf16.msra.mxu0 0
    %874 = vmatprep.subr.bf16.mxu0 0
    %875 = vmatpush1.bf16.msra.mxu0 0
    %876 = vmatprep.subr.bf16.mxu0 0
    %877 = vmatpush1.bf16.msra.mxu0 0
    %878 = vmatprep.subr.bf16.mxu0 0
    %879 = vmatpush1.bf16.msra.mxu0 0
    %880 = vmatprep.subr.bf16.mxu0 0
    %881 = vmatpush1.bf16.msra.mxu0 0
    %882 = vmatprep.subr.bf16.mxu0 0
    %883 = vmatpush1.bf16.msra.mxu0 0
    %884 = vmatprep.subr.bf16.mxu0 0
    %885 = vmatpush1.bf16.msra.mxu0 0
    %886 = vmatprep.subr.bf16.mxu0 0
    %887 = vmatpush1.bf16.msra.mxu0 0
    %888 = vmatprep.mubr.bf16.mxu0 0
    %889 = vmatmul.mubr.bf16.gmra.mrb[0].mxu0 %v784
    %v890 = vpop.f32.mrb[0].mxu0
    %v891 = vadd.f32 %v806, %v890
    %v892 = vpop.f32.mrb[0].mxu0
    %v893 = vpop.f32.mrb[0].mxu0
    %v894 = vpop.f32.mrb[0].mxu0
    %895 = vdwg.mxu0
    %896 = vst [vmem:[%s7] sm:$0xff] %v891
    // Predicated region
    $region34: #{_forward_impl.1} parent=1 // pred_check
      _
    $region35: #{_forward_impl.1} parent=1 // pred_check_branch
      %898 = sbr.rel (0) target = $region37
    $region36: #{_forward_impl.1} parent=1 // pred_region
      _
    $region37: #{_forward_impl.1} parent=1 // pred_fallthru
      _
    // Predicated region
    $region38: #{_forward_impl.1} parent=1 // pred_check
      _
    $region39: #{_forward_impl.1} parent=1 // pred_check_branch
      %900 = sbr.rel (0) target = $region41
    $region40: #{_forward_impl.1} parent=1 // pred_region
      _
    $region41: #{_forward_impl.1} parent=1 // pred_fallthru
      _
    %901 = vsyncpa [#allocation3], 1

</llo_original>
